<compile_context>
chip_gen: v6e
topology: v6e:2x2x1
jax: 0.10.0
libtpu: 0.0.40
codegen_flags: <defaults>
</compile_context>

<pallas_src>
import functools

import jax
import jax.numpy as jnp
from jax.experimental import pallas as pl
from jax.experimental.pallas import tpu as pltpu


def _round_up(a: int, b: int) -> int:
    return -(-a // b) * b


# ---------------------------------------------------------------------------
# Pallas kernel: one row-tile of the flattened output.
#   out = relu(P_tile @ W + b), single MXU matmul, f32 accumulation/epilogue.
# ---------------------------------------------------------------------------
def _matmul_bias_relu_kernel(p_ref, w_ref, b_ref, o_ref):
    acc = jnp.dot(p_ref[...], w_ref[...], preferred_element_type=jnp.float32)
    o_ref[...] = jnp.maximum(acc + b_ref[...], 0.0).astype(o_ref.dtype)


def conv2d_relu_nhwc(x, w, b, stride, out_dtype):
    """x: (N, H, W, C) NHWC; w: (OC, C, KH, KW) PyTorch layout; b: (OC,).
    Returns relu(conv2d(x, w, stride, VALID) + b) as (N, OH, OW, OC)."""
    N, H, W_, C = x.shape
    OC, _, KH, KW = w.shape
    S = stride
    OH = (H - KH) // S + 1
    OW = (W_ - KW) // S + 1
    K = KH * KW * C                     # full contraction on the lane axis
    R = N * OH * OW                     # batch + spatial flattened into rows

    # --- JAX-side patch extraction (contiguous strided slices, bf16) --------
    xb = x.astype(jnp.bfloat16)
    cols = []
    for i in range(KH):
        for j in range(KW):
            cols.append(xb[:, i:i + S * (OH - 1) + 1:S,
                           j:j + S * (OW - 1) + 1:S, :])      # (N, OH, OW, C)
    p = jnp.concatenate(cols, axis=-1).reshape(R, K)          # (R, KH*KW*C)

    # Row tile: big enough to keep the MXU busy, padded to a multiple of 8.
    TM = 256 if R >= 256 else _round_up(R, 8)
    Rp = _round_up(R, TM)
    if Rp != R:
        p = jnp.pad(p, ((0, Rp - R), (0, 0)))

    # --- weights / bias: (K, OCp) with OC zero-padded to a full 128 lanes ---
    OCp = _round_up(OC, 128)
    wm = jnp.transpose(w, (2, 3, 1, 0)).reshape(K, OC)        # (i, j, c) -> K
    wm = jnp.pad(wm, ((0, 0), (0, OCp - OC))).astype(jnp.bfloat16)
    bm = jnp.pad(b, (0, OCp - OC)).reshape(1, OCp).astype(jnp.float32)

    cost = pl.CostEstimate(
        flops=2 * Rp * K * OCp,
        transcendentals=0,
        bytes_accessed=(Rp * K * 2 + K * OCp * 2 + OCp * 4
                        + Rp * OCp * jnp.dtype(out_dtype).itemsize),
    )

    out = pl.pallas_call(
        _matmul_bias_relu_kernel,
        out_shape=jax.ShapeDtypeStruct((Rp, OCp), out_dtype),
        grid=(Rp // TM,),
        in_specs=[
            pl.BlockSpec((TM, K), lambda r: (r, 0)),
            pl.BlockSpec((K, OCp), lambda r: (0, 0)),   # resident across steps
            pl.BlockSpec((1, OCp), lambda r: (0, 0)),
        ],
        out_specs=pl.BlockSpec((TM, OCp), lambda r: (r, 0)),
        compiler_params=pltpu.CompilerParams(
            dimension_semantics=("parallel",),
            vmem_limit_bytes=32 * 1024 * 1024,
        ),
        cost_estimate=cost,
    )(p, wm, bm)

    return out[:R, :OC].reshape(N, OH, OW, OC)


# ---------------------------------------------------------------------------
# Parameter init (deterministic, PyTorch-like uniform(-1/sqrt(fan_in), ...))
# ---------------------------------------------------------------------------
def init_params(in_dim: int, key: jax.Array):
    def conv_init(k, oc, ic, ksz):
        kw_, kb_ = jax.random.split(k)
        fan_in = ic * ksz * ksz
        bound = 1.0 / (fan_in ** 0.5)
        w = jax.random.uniform(kw_, (oc, ic, ksz, ksz), jnp.float32, -bound, bound)
        b = jax.random.uniform(kb_, (oc,), jnp.float32, -bound, bound)
        return w, b

    k1, k2, k3 = jax.random.split(key, 3)
    w1, b1 = conv_init(k1, 32, in_dim, 8)
    w2, b2 = conv_init(k2, 64, 32, 4)
    w3, b3 = conv_init(k3, 64, 64, 3)
    return dict(w1=w1, b1=b1, w2=w2, b2=b2, w3=w3, b3=b3)


def convolutional_layer_forward(x_nchw: jax.Array, params) -> jax.Array:
    # NHWC internal layout across all three layers; NCHW only at the boundary.
    x = jnp.transpose(x_nchw, (0, 2, 3, 1))
    x = conv2d_relu_nhwc(x, params["w1"], params["b1"], 4, jnp.bfloat16)
    x = conv2d_relu_nhwc(x, params["w2"], params["b2"], 2, jnp.bfloat16)
    x = conv2d_relu_nhwc(x, params["w3"], params["b3"], 1, jnp.float32)
    return jnp.transpose(x, (0, 3, 1, 2))


# ---------------------------------------------------------------------------
# Reference (pure JAX/XLA, f32) for a correctness check
# ---------------------------------------------------------------------------
def _ref_conv_relu(x, w, b, stride):
    y = jax.lax.conv_general_dilated(
        x, w, window_strides=(stride, stride), padding="VALID",
        dimension_numbers=("NCHW", "OIHW", "NCHW"))
    return jnp.maximum(y + b[None, :, None, None], 0.0)


def _ref_forward(x, params):
    x = _ref_conv_relu(x, params["w1"], params["b1"], 4)
    x = _ref_conv_relu(x, params["w2"], params["b2"], 2)
    x = _ref_conv_relu(x, params["w3"], params["b3"], 1)
    return x


if __name__ == "__main__":
    key = jax.random.PRNGKey(0)
    kx, kp = jax.random.split(key)

    # Smallest valid spatial size for the k8/s4 -> k4/s2 -> k3/s1 stack:
    # 36 -> 8 -> 3 -> 1
    batch, in_dim, spatial = 2, 4, 36
    x = jax.random.normal(kx, (batch, in_dim, spatial, spatial), jnp.float32)
    params = init_params(in_dim, kp)

    fwd = jax.jit(convolutional_layer_forward)
    out = jax.block_until_ready(fwd(x, params))

    ref = jax.block_until_ready(_ref_forward(x, params))
    assert out.shape == (batch, 64, 1, 1), out.shape
    max_err = float(jnp.max(jnp.abs(out - ref)))
    # bf16 MXU operands -> looser tolerance than a pure-f32 path.
    assert jnp.allclose(out, ref, atol=5e-2, rtol=5e-2), max_err

    print("KERNEL_OK")
</pallas_src>

<mosaic_0001>
module attributes {stable_mosaic.version = 11 : i64} {
  func.func @_matmul_bias_relu_kernel(%arg0: i32, %arg1: memref<128x256xbf16, #tpu.memory_space<vmem>>, %arg2: memref<256x128xbf16, #tpu.memory_space<vmem>>, %arg3: memref<1x128xf32, #tpu.memory_space<vmem>>, %arg4: memref<128x128xbf16, #tpu.memory_space<vmem>>) attributes {dimension_semantics = [#tpu.dimension_semantics<parallel>], iteration_bounds = array<i64: 1>, scalar_prefetch = 0 : i64, scratch_operands = 0 : i64, tpu.core_type = #tpu.core_type<tc>, window_params = [{transform_indices = @transform_0, window_bounds = array<i64: 128, 256>}, {pipeline_mode = #tpu.pipeline_mode<synchronous>, transform_indices = @transform_1, window_bounds = array<i64: 256, 128>}, {pipeline_mode = #tpu.pipeline_mode<synchronous>, transform_indices = @transform_2, window_bounds = array<i64: 1, 128>}, {transform_indices = @transform_3, window_bounds = array<i64: 128, 128>}]} {
    %c0 = arith.constant 0 : index
    %c0_0 = arith.constant 0 : index
    %0 = vector.load %arg1[%c0, %c0_0] : memref<128x256xbf16, #tpu.memory_space<vmem>>, vector<128x256xbf16>
    %c0_1 = arith.constant 0 : index
    %c0_2 = arith.constant 0 : index
    %1 = vector.load %arg2[%c0_1, %c0_2] : memref<256x128xbf16, #tpu.memory_space<vmem>>, vector<256x128xbf16>
    %cst = arith.constant dense<0.000000e+00> : vector<128x128xf32>
    %2 = tpu.matmul %0, %1, %cst {dimension_numbers = #tpu.dot_dimension_numbers<[1], [0], [0], [1], [0, 0, 1, 1], [], []>} : vector<128x256xbf16>, vector<256x128xbf16>, vector<128x128xf32> -> vector<128x128xf32>
    %c0_3 = arith.constant 0 : index
    %c0_4 = arith.constant 0 : index
    %3 = vector.load %arg3[%c0_3, %c0_4] : memref<1x128xf32, #tpu.memory_space<vmem>>, vector<1x128xf32>
    %4 = vector.broadcast %3 : vector<1x128xf32> to vector<128x128xf32>
    %5 = arith.addf %2, %4 : vector<128x128xf32>
    %cst_5 = arith.constant 0.000000e+00 : f32
    %6 = vector.broadcast %cst_5 : f32 to vector<128x128xf32>
    %7 = arith.maximumf %5, %6 : vector<128x128xf32>
    %8 = arith.truncf %7 : vector<128x128xf32> to vector<128x128xbf16>
    %c0_6 = arith.constant 0 : index
    %c0_7 = arith.constant 0 : index
    %9 = vector.load %arg4[%c0_6, %c0_7] : memref<128x128xbf16, #tpu.memory_space<vmem>>, vector<128x128xbf16>
    tpu.vector_store %arg4[%c0_6, %c0_7], %8 {strides = array<i32>} : memref<128x128xbf16, #tpu.memory_space<vmem>>, vector<128x128xbf16>,
    return
  }
  func.func @transform_0(%arg0: i32) -> (i32, i32) {
    %c0_i32 = arith.constant 0 : i32
    %c0_i32_0 = arith.constant 0 : i32
    return %arg0, %c0_i32 : i32, i32
  }
  func.func @transform_1(%arg0: i32) -> (i32, i32) {
    %c0_i32 = arith.constant 0 : i32
    %c0_i32_0 = arith.constant 0 : i32
    %c0_i32_1 = arith.constant 0 : i32
    return %c0_i32, %c0_i32_0 : i32, i32
  }
  func.func @transform_2(%arg0: i32) -> (i32, i32) {
    %c0_i32 = arith.constant 0 : i32
    %c0_i32_0 = arith.constant 0 : i32
    %c0_i32_1 = arith.constant 0 : i32
    return %c0_i32, %c0_i32_0 : i32, i32
  }
  func.func @transform_3(%arg0: i32) -> (i32, i32) {
    %c0_i32 = arith.constant 0 : i32
    %c0_i32_0 = arith.constant 0 : i32
    return %arg0, %c0_i32 : i32, i32
  }
}

module attributes {stable_mosaic.version = 11 : i64} {
  func.func @_matmul_bias_relu_kernel(%arg0: i32, %arg1: memref<24x512xbf16, #tpu.memory_space<vmem>>, %arg2: memref<512x128xbf16, #tpu.memory_space<vmem>>, %arg3: memref<1x128xf32, #tpu.memory_space<vmem>>, %arg4: memref<24x128xbf16, #tpu.memory_space<vmem>>) attributes {dimension_semantics = [#tpu.dimension_semantics<parallel>], iteration_bounds = array<i64: 1>, scalar_prefetch = 0 : i64, scratch_operands = 0 : i64, tpu.core_type = #tpu.core_type<tc>, window_params = [{transform_indices = @transform_0, window_bounds = array<i64: 24, 512>}, {pipeline_mode = #tpu.pipeline_mode<synchronous>, transform_indices = @transform_1, window_bounds = array<i64: 512, 128>}, {pipeline_mode = #tpu.pipeline_mode<synchronous>, transform_indices = @transform_2, window_bounds = array<i64: 1, 128>}, {transform_indices = @transform_3, window_bounds = array<i64: 24, 128>}]} {
    %c0 = arith.constant 0 : index
    %c0_0 = arith.constant 0 : index
    %0 = vector.load %arg1[%c0, %c0_0] : memref<24x512xbf16, #tpu.memory_space<vmem>>, vector<24x512xbf16>
    %c0_1 = arith.constant 0 : index
    %c0_2 = arith.constant 0 : index
    %1 = vector.load %arg2[%c0_1, %c0_2] : memref<512x128xbf16, #tpu.memory_space<vmem>>, vector<512x128xbf16>
    %cst = arith.constant dense<0.000000e+00> : vector<24x128xf32>
    %2 = tpu.matmul %0, %1, %cst {dimension_numbers = #tpu.dot_dimension_numbers<[1], [0], [0], [1], [0, 0, 1, 1], [], []>} : vector<24x512xbf16>, vector<512x128xbf16>, vector<24x128xf32> -> vector<24x128xf32>
    %c0_3 = arith.constant 0 : index
    %c0_4 = arith.constant 0 : index
    %3 = vector.load %arg3[%c0_3, %c0_4] : memref<1x128xf32, #tpu.memory_space<vmem>>, vector<1x128xf32>
    %4 = vector.broadcast %3 : vector<1x128xf32> to vector<24x128xf32>
    %5 = arith.addf %2, %4 : vector<24x128xf32>
    %cst_5 = arith.constant 0.000000e+00 : f32
    %6 = vector.broadcast %cst_5 : f32 to vector<24x128xf32>
    %7 = arith.maximumf %5, %6 : vector<24x128xf32>
    %8 = arith.truncf %7 : vector<24x128xf32> to vector<24x128xbf16>
    %c0_6 = arith.constant 0 : index
    %c0_7 = arith.constant 0 : index
    %9 = vector.load %arg4[%c0_6, %c0_7] : memref<24x128xbf16, #tpu.memory_space<vmem>>, vector<24x128xbf16>
    tpu.vector_store %arg4[%c0_6, %c0_7], %8 {strides = array<i32>} : memref<24x128xbf16, #tpu.memory_space<vmem>>, vector<24x128xbf16>,
    return
  }
  func.func @transform_0(%arg0: i32) -> (i32, i32) {
    %c0_i32 = arith.constant 0 : i32
    %c0_i32_0 = arith.constant 0 : i32
    return %arg0, %c0_i32 : i32, i32
  }
  func.func @transform_1(%arg0: i32) -> (i32, i32) {
    %c0_i32 = arith.constant 0 : i32
    %c0_i32_0 = arith.constant 0 : i32
    %c0_i32_1 = arith.constant 0 : i32
    return %c0_i32, %c0_i32_0 : i32, i32
  }
  func.func @transform_2(%arg0: i32) -> (i32, i32) {
    %c0_i32 = arith.constant 0 : i32
    %c0_i32_0 = arith.constant 0 : i32
    %c0_i32_1 = arith.constant 0 : i32
    return %c0_i32, %c0_i32_0 : i32, i32
  }
  func.func @transform_3(%arg0: i32) -> (i32, i32) {
    %c0_i32 = arith.constant 0 : i32
    %c0_i32_0 = arith.constant 0 : i32
    return %arg0, %c0_i32 : i32, i32
  }
}

module attributes {stable_mosaic.version = 11 : i64} {
  func.func @_matmul_bias_relu_kernel(%arg0: i32, %arg1: memref<8x576xbf16, #tpu.memory_space<vmem>>, %arg2: memref<576x128xbf16, #tpu.memory_space<vmem>>, %arg3: memref<1x128xf32, #tpu.memory_space<vmem>>, %arg4: memref<8x128xf32, #tpu.memory_space<vmem>>) attributes {dimension_semantics = [#tpu.dimension_semantics<parallel>], iteration_bounds = array<i64: 1>, scalar_prefetch = 0 : i64, scratch_operands = 0 : i64, tpu.core_type = #tpu.core_type<tc>, window_params = [{transform_indices = @transform_0, window_bounds = array<i64: 8, 576>}, {pipeline_mode = #tpu.pipeline_mode<synchronous>, transform_indices = @transform_1, window_bounds = array<i64: 576, 128>}, {pipeline_mode = #tpu.pipeline_mode<synchronous>, transform_indices = @transform_2, window_bounds = array<i64: 1, 128>}, {transform_indices = @transform_3, window_bounds = array<i64: 8, 128>}]} {
    %c0 = arith.constant 0 : index
    %c0_0 = arith.constant 0 : index
    %0 = vector.load %arg1[%c0, %c0_0] : memref<8x576xbf16, #tpu.memory_space<vmem>>, vector<8x576xbf16>
    %c0_1 = arith.constant 0 : index
    %c0_2 = arith.constant 0 : index
    %1 = vector.load %arg2[%c0_1, %c0_2] : memref<576x128xbf16, #tpu.memory_space<vmem>>, vector<576x128xbf16>
    %cst = arith.constant dense<0.000000e+00> : vector<8x128xf32>
    %2 = tpu.matmul %0, %1, %cst {dimension_numbers = #tpu.dot_dimension_numbers<[1], [0], [0], [1], [0, 0, 1, 1], [], []>} : vector<8x576xbf16>, vector<576x128xbf16>, vector<8x128xf32> -> vector<8x128xf32>
    %c0_3 = arith.constant 0 : index
    %c0_4 = arith.constant 0 : index
    %3 = vector.load %arg3[%c0_3, %c0_4] : memref<1x128xf32, #tpu.memory_space<vmem>>, vector<1x128xf32>
    %4 = vector.broadcast %3 : vector<1x128xf32> to vector<8x128xf32>
    %5 = arith.addf %2, %4 : vector<8x128xf32>
    %cst_5 = arith.constant 0.000000e+00 : f32
    %6 = vector.broadcast %cst_5 : f32 to vector<8x128xf32>
    %7 = arith.maximumf %5, %6 : vector<8x128xf32>
    %c0_6 = arith.constant 0 : index
    %c0_7 = arith.constant 0 : index
    %8 = vector.load %arg4[%c0_6, %c0_7] : memref<8x128xf32, #tpu.memory_space<vmem>>, vector<8x128xf32>
    tpu.vector_store %arg4[%c0_6, %c0_7], %7 {strides = array<i32>} : memref<8x128xf32, #tpu.memory_space<vmem>>, vector<8x128xf32>,
    return
  }
  func.func @transform_0(%arg0: i32) -> (i32, i32) {
    %c0_i32 = arith.constant 0 : i32
    %c0_i32_0 = arith.constant 0 : i32
    return %arg0, %c0_i32 : i32, i32
  }
  func.func @transform_1(%arg0: i32) -> (i32, i32) {
    %c0_i32 = arith.constant 0 : i32
    %c0_i32_0 = arith.constant 0 : i32
    %c0_i32_1 = arith.constant 0 : i32
    return %c0_i32, %c0_i32_0 : i32, i32
  }
  func.func @transform_2(%arg0: i32) -> (i32, i32) {
    %c0_i32 = arith.constant 0 : i32
    %c0_i32_0 = arith.constant 0 : i32
    %c0_i32_1 = arith.constant 0 : i32
    return %c0_i32, %c0_i32_0 : i32, i32
  }
  func.func @transform_3(%arg0: i32) -> (i32, i32) {
    %c0_i32 = arith.constant 0 : i32
    %c0_i32_0 = arith.constant 0 : i32
    return %arg0, %c0_i32 : i32, i32
  }
}

</mosaic_0001>

<llo_original>
// kernel: convolutional_layer_forward.3
$region0: #{convolutional_layer_forward.3}
  #allocation0 [shape = 'u32[]', space=smem, size = 0x4, offset = 0x4, fixed_abs, tag = 'smem constant byte address 0x4 - core index']
  #allocation1 [shape = 'u32[144,128]{1,0:T(1,128)}', space=vmem, size = 0x12000, scoped, tag = 'internal scratch']
  %s0 = inlined_call_operand.vmem [shape: bf16[128,256], index: 0, kind: input, shape index: {}]
  %s1 = inlined_call_operand.vmem [shape: bf16[256,128], index: 1, kind: input, shape index: {}]
  %s2 = inlined_call_operand.vmem [shape: f32[1,128], index: 2, kind: input, shape index: {}]
  %s3 = inlined_call_operand.vmem [shape: bf16[128,128], index: 3, kind: output, shape index: {}]
  %s4 = sld [smem:[#allocation0]]
  $region22: #{convolutional_layer_forward.3} parent=0
    _
  %s6 = ssub.s32 1, %s4
  %s7 = scalar_select 0, %s6, %s4
  // Predicated region
  $region2: #{convolutional_layer_forward.3} parent=0 // pred_check
    _
  $region3: #{convolutional_layer_forward.3} parent=0 // pred_check_branch
    %9 = sbr.rel (0) target = $region5
  $region4: #{convolutional_layer_forward.3} parent=0 // pred_region
    _
  $region5: #{convolutional_layer_forward.3} parent=0 // pred_fallthru
    _
  // Predicated region
  $region6: #{convolutional_layer_forward.3} parent=0 // pred_check
    _
  $region7: #{convolutional_layer_forward.3} parent=0 // pred_check_branch
    %11 = sbr.rel (0) target = $region9
  $region8: #{convolutional_layer_forward.3} parent=0 // pred_region
    _
  $region9: #{convolutional_layer_forward.3} parent=0 // pred_fallthru
    _
  // Predicated region
  $region10: #{convolutional_layer_forward.3} parent=0 // pred_check
    _
  $region11: #{convolutional_layer_forward.3} parent=0 // pred_check_branch
    %13 = sbr.rel (0) target = $region13
  $region12: #{convolutional_layer_forward.3} parent=0 // pred_region
    _
  $region13: #{convolutional_layer_forward.3} parent=0 // pred_fallthru
    _
  %v15 = vld [vmem:[%s0] sm:$0xff]
  %v16 = vld [vmem:[%s0 + $0x8] sm:$0xff]
  %v17 = vld [vmem:[%s0 + $0x10] sm:$0xff]
  %v18 = vld [vmem:[%s0 + $0x18] sm:$0xff]
  %v19 = vld [vmem:[%s0 + $0x20] sm:$0xff]
  %v20 = vld [vmem:[%s0 + $0x28] sm:$0xff]
  %v21 = vld [vmem:[%s0 + $0x30] sm:$0xff]
  %v22 = vld [vmem:[%s0 + $0x38] sm:$0xff]
  %v23 = vld [vmem:[%s0 + $0x40] sm:$0xff]
  %v24 = vld [vmem:[%s0 + $0x48] sm:$0xff]
  %v25 = vld [vmem:[%s0 + $0x50] sm:$0xff]
  %v26 = vld [vmem:[%s0 + $0x58] sm:$0xff]
  %v27 = vld [vmem:[%s0 + $0x60] sm:$0xff]
  %v28 = vld [vmem:[%s0 + $0x68] sm:$0xff]
  %v29 = vld [vmem:[%s0 + $0x70] sm:$0xff]
  %v30 = vld [vmem:[%s0 + $0x78] sm:$0xff]
  %v31 = vld [vmem:[%s1] sm:$0xf]
  %v32 = vld [vmem:[%s1 + $0x4] sm:$0xf]
  %v33 = vld [vmem:[%s1 + $0x8] sm:$0xf]
  %v34 = vld [vmem:[%s1 + $0xc] sm:$0xf]
  %v35 = vld [vmem:[%s1 + $0x10] sm:$0xf]
  %v36 = vld [vmem:[%s1 + $0x14] sm:$0xf]
  %v37 = vld [vmem:[%s1 + $0x18] sm:$0xf]
  %v38 = vld [vmem:[%s1 + $0x1c] sm:$0xf]
  %v39 = vld [vmem:[%s1 + $0x20] sm:$0xf]
  %v40 = vld [vmem:[%s1 + $0x24] sm:$0xf]
  %v41 = vld [vmem:[%s1 + $0x28] sm:$0xf]
  %v42 = vld [vmem:[%s1 + $0x2c] sm:$0xf]
  %v43 = vld [vmem:[%s1 + $0x30] sm:$0xf]
  %v44 = vld [vmem:[%s1 + $0x34] sm:$0xf]
  %v45 = vld [vmem:[%s1 + $0x38] sm:$0xf]
  %v46 = vld [vmem:[%s1 + $0x3c] sm:$0xf]
  %v47 = vld [vmem:[%s1 + $0x40] sm:$0xf]
  %v48 = vld [vmem:[%s1 + $0x44] sm:$0xf]
  %v49 = vld [vmem:[%s1 + $0x48] sm:$0xf]
  %v50 = vld [vmem:[%s1 + $0x4c] sm:$0xf]
  %v51 = vld [vmem:[%s1 + $0x50] sm:$0xf]
  %v52 = vld [vmem:[%s1 + $0x54] sm:$0xf]
  %v53 = vld [vmem:[%s1 + $0x58] sm:$0xf]
  %v54 = vld [vmem:[%s1 + $0x5c] sm:$0xf]
  %v55 = vld [vmem:[%s1 + $0x60] sm:$0xf]
  %v56 = vld [vmem:[%s1 + $0x64] sm:$0xf]
  %v57 = vld [vmem:[%s1 + $0x68] sm:$0xf]
  %v58 = vld [vmem:[%s1 + $0x6c] sm:$0xf]
  %v59 = vld [vmem:[%s1 + $0x70] sm:$0xf]
  %v60 = vld [vmem:[%s1 + $0x74] sm:$0xf]
  %v61 = vld [vmem:[%s1 + $0x78] sm:$0xf]
  %v62 = vld [vmem:[%s1 + $0x7c] sm:$0xf]
  %v63 = vld [vmem:[%s2] sm:$0x1]
  %v65 = vlaneseq
  %v66 = vshrl.u32 %v65, 7
  %v67 = vsub.s32 0, %v66
  %v68 = vrot.slane %v63, %v67
  %v86 = vunpack.c.l.b16 %v15
  %v87 = vunpack.c.h.b16 %v15
  %v88 = vunpack.c.l.b16 %v16
  %v89 = vunpack.c.h.b16 %v16
  %v90 = vunpack.c.l.b16 %v17
  %v91 = vunpack.c.h.b16 %v17
  %v92 = vunpack.c.l.b16 %v18
  %v93 = vunpack.c.h.b16 %v18
  %v94 = vunpack.c.l.b16 %v19
  %v95 = vunpack.c.h.b16 %v19
  %v96 = vunpack.c.l.b16 %v20
  %v97 = vunpack.c.h.b16 %v20
  %v98 = vunpack.c.l.b16 %v21
  %v99 = vunpack.c.h.b16 %v21
  %v100 = vunpack.c.l.b16 %v22
  %v101 = vunpack.c.h.b16 %v22
  %v102 = vunpack.c.l.b16 %v23
  %v103 = vunpack.c.h.b16 %v23
  %v104 = vunpack.c.l.b16 %v24
  %v105 = vunpack.c.h.b16 %v24
  %v106 = vunpack.c.l.b16 %v25
  %v107 = vunpack.c.h.b16 %v25
  %v108 = vunpack.c.l.b16 %v26
  %v109 = vunpack.c.h.b16 %v26
  %v110 = vunpack.c.l.b16 %v27
  %v111 = vunpack.c.h.b16 %v27
  %v112 = vunpack.c.l.b16 %v28
  %v113 = vunpack.c.h.b16 %v28
  %v114 = vunpack.c.l.b16 %v29
  %v115 = vunpack.c.h.b16 %v29
  %v116 = vunpack.c.l.b16 %v30
  %v117 = vunpack.c.h.b16 %v30
  %v118 = vpack.c.b16 %v88, %v86
  %v119 = vpack.c.b16 %v89, %v87
  %v120 = vpack.c.b16 %v92, %v90
  %v121 = vpack.c.b16 %v93, %v91
  %v122 = vpack.c.b16 %v96, %v94
  %v123 = vpack.c.b16 %v97, %v95
  %v124 = vpack.c.b16 %v100, %v98
  %v125 = vpack.c.b16 %v101, %v99
  %v126 = vpack.c.b16 %v104, %v102
  %v127 = vpack.c.b16 %v105, %v103
  %v128 = vpack.c.b16 %v108, %v106
  %v129 = vpack.c.b16 %v109, %v107
  %v130 = vpack.c.b16 %v112, %v110
  %v131 = vpack.c.b16 %v113, %v111
  %v132 = vpack.c.b16 %v116, %v114
  %v133 = vpack.c.b16 %v117, %v115
  %v182 = vunpack.c.l.b16 %v31
  %v183 = vunpack.c.l.b16 %v32
  %v184 = vunpack.c.l.b16 %v33
  %v185 = vunpack.c.l.b16 %v34
  %v186 = vunpack.c.l.b16 %v35
  %v187 = vunpack.c.l.b16 %v36
  %v188 = vunpack.c.l.b16 %v37
  %v189 = vunpack.c.l.b16 %v38
  %v190 = vunpack.c.l.b16 %v39
  %v191 = vunpack.c.l.b16 %v40
  %v192 = vunpack.c.l.b16 %v41
  %v193 = vunpack.c.l.b16 %v42
  %v194 = vunpack.c.l.b16 %v43
  %v195 = vunpack.c.l.b16 %v44
  %v196 = vunpack.c.l.b16 %v45
  %v197 = vunpack.c.l.b16 %v46
  %v198 = vunpack.c.l.b16 %v47
  %v199 = vunpack.c.l.b16 %v48
  %v200 = vunpack.c.l.b16 %v49
  %v201 = vunpack.c.l.b16 %v50
  %v202 = vunpack.c.l.b16 %v51
  %v203 = vunpack.c.l.b16 %v52
  %v204 = vunpack.c.l.b16 %v53
  %v205 = vunpack.c.l.b16 %v54
  %v206 = vunpack.c.l.b16 %v55
  %v207 = vunpack.c.l.b16 %v56
  %v208 = vunpack.c.l.b16 %v57
  %v209 = vunpack.c.l.b16 %v58
  %v210 = vunpack.c.l.b16 %v59
  %v211 = vunpack.c.l.b16 %v60
  %v212 = vunpack.c.l.b16 %v61
  %v213 = vunpack.c.l.b16 %v62
  %v214 = vpack.c.b16 %v183, %v182
  %v215 = vpack.c.b16 %v185, %v184
  %v216 = vpack.c.b16 %v187, %v186
  %v217 = vpack.c.b16 %v189, %v188
  %v218 = vpack.c.b16 %v191, %v190
  %v219 = vpack.c.b16 %v193, %v192
  %v220 = vpack.c.b16 %v195, %v194
  %v221 = vpack.c.b16 %v197, %v196
  %v222 = vpack.c.b16 %v199, %v198
  %v223 = vpack.c.b16 %v201, %v200
  %v224 = vpack.c.b16 %v203, %v202
  %v225 = vpack.c.b16 %v205, %v204
  %v226 = vpack.c.b16 %v207, %v206
  %v227 = vpack.c.b16 %v209, %v208
  %v228 = vpack.c.b16 %v211, %v210
  %v229 = vpack.c.b16 %v213, %v212
  %246 = vmatprep.subr.bf16.mxu0 0
  %247 = vmatpush1.bf16.msra.mxu0 %v221
  %248 = vmatprep.subr.bf16.mxu0 0
  %249 = vmatpush1.bf16.msra.mxu0 %v220
  %250 = vmatprep.subr.bf16.mxu0 0
  %251 = vmatpush1.bf16.msra.mxu0 %v219
  %252 = vmatprep.subr.bf16.mxu0 0
  %253 = vmatpush1.bf16.msra.mxu0 %v218
  %254 = vmatprep.subr.bf16.mxu0 0
  %255 = vmatpush1.bf16.msra.mxu0 %v217
  %256 = vmatprep.subr.bf16.mxu0 0
  %257 = vmatpush1.bf16.msra.mxu0 %v216
  %258 = vmatprep.subr.bf16.mxu0 0
  %259 = vmatpush1.bf16.msra.mxu0 %v215
  %260 = vmatprep.subr.bf16.mxu0 0
  %261 = vmatpush1.bf16.msra.mxu0 %v214
  %262 = vmatprep.subr.bf16.mxu0 0
  %263 = vmatpush2.bf16.msra.mxu0 %v229
  %264 = vmatprep.subr.bf16.mxu0 0
  %265 = vmatpush2.bf16.msra.mxu0 %v228
  %266 = vmatprep.subr.bf16.mxu0 0
  %267 = vmatpush2.bf16.msra.mxu0 %v227
  %268 = vmatprep.subr.bf16.mxu0 0
  %269 = vmatpush2.bf16.msra.mxu0 %v226
  %270 = vmatprep.subr.bf16.mxu0 0
  %271 = vmatpush2.bf16.msra.mxu0 %v225
  %272 = vmatprep.subr.bf16.mxu0 0
  %273 = vmatpush2.bf16.msra.mxu0 %v224
  %274 = vmatprep.subr.bf16.mxu0 0
  %275 = vmatpush2.bf16.msra.mxu0 %v223
  %276 = vmatprep.subr.bf16.mxu0 0
  %277 = vmatpush2.bf16.msra.mxu0 %v222
  %278 = vmatprep.mubr.bf16.mxu0 %v119
  %279 = vmatmul.mubr.bf16.gmra.mxu0 %v118
  %v280 = vpop.f32.mrf.mxu0
  %v281 = vadd.f32 %v68, %v280
  %v282 = vpop.f32.mrf.mxu0
  %v283 = vpop.f32.mrf.mxu0
  %v284 = vadd.f32 %v68, %v283
  %v285 = vpop.f32.mrf.mxu0
  %286 = vmatprep.mubr.bf16.mxu0 %v121
  %287 = vmatmul.mubr.bf16.gmra.mxu0 %v120
  %v288 = vpop.f32.mrf.mxu0
  %v289 = vadd.f32 %v68, %v288
  %v290 = vpop.f32.mrf.mxu0
  %v291 = vpop.f32.mrf.mxu0
  %v292 = vadd.f32 %v68, %v291
  %v293 = vpop.f32.mrf.mxu0
  %294 = vmatprep.mubr.bf16.mxu0 %v123
  %295 = vmatmul.mubr.bf16.gmra.mxu0 %v122
  %v296 = vpop.f32.mrf.mxu0
  %v297 = vadd.f32 %v68, %v296
  %v298 = vpop.f32.mrf.mxu0
  %v299 = vpop.f32.mrf.mxu0
  %v300 = vadd.f32 %v68, %v299
  %v301 = vpop.f32.mrf.mxu0
  %302 = vmatprep.mubr.bf16.mxu0 %v125
  %303 = vmatmul.mubr.bf16.gmra.mxu0 %v124
  %v304 = vpop.f32.mrf.mxu0
  %v305 = vadd.f32 %v68, %v304
  %v306 = vpop.f32.mrf.mxu0
  %v307 = vpop.f32.mrf.mxu0
  %v308 = vadd.f32 %v68, %v307
  %v309 = vpop.f32.mrf.mxu0
  %310 = vmatprep.mubr.bf16.mxu0 %v127
  %311 = vmatmul.mubr.bf16.gmra.mxu0 %v126
  %v312 = vpop.f32.mrf.mxu0
  %v313 = vadd.f32 %v68, %v312
  %v314 = vpop.f32.mrf.mxu0
  %v315 = vpop.f32.mrf.mxu0
  %v316 = vadd.f32 %v68, %v315
  %v317 = vpop.f32.mrf.mxu0
  %318 = vmatprep.mubr.bf16.mxu0 %v129
  %319 = vmatmul.mubr.bf16.gmra.mxu0 %v128
  %v320 = vpop.f32.mrf.mxu0
  %v321 = vadd.f32 %v68, %v320
  %v322 = vpop.f32.mrf.mxu0
  %v323 = vpop.f32.mrf.mxu0
  %v324 = vadd.f32 %v68, %v323
  %v325 = vpop.f32.mrf.mxu0
  %326 = vmatprep.mubr.bf16.mxu0 %v131
  %327 = vmatmul.mubr.bf16.gmra.mxu0 %v130
  %v328 = vpop.f32.mrf.mxu0
  %v329 = vadd.f32 %v68, %v328
  %v330 = vpop.f32.mrf.mxu0
  %v331 = vpop.f32.mrf.mxu0
  %v332 = vadd.f32 %v68, %v331
  %v333 = vpop.f32.mrf.mxu0
  %334 = vmatprep.mubr.bf16.mxu0 %v133
  %335 = vmatmul.mubr.bf16.gmra.mxu0 %v132
  %v336 = vpop.f32.mrf.mxu0
  %v337 = vadd.f32 %v68, %v336
  %v338 = vpop.f32.mrf.mxu0
  %v339 = vpop.f32.mrf.mxu0
  %v340 = vadd.f32 %v68, %v339
  %v341 = vpop.f32.mrf.mxu0
  %342 = vdwg.mxu0
  %v343 = vmax.f32 %v281, 0.0
  %v344 = vmax.f32 %v284, 0.0
  %v345 = vmax.f32 %v289, 0.0
  %v346 = vmax.f32 %v292, 0.0
  %v347 = vmax.f32 %v297, 0.0
  %v348 = vmax.f32 %v300, 0.0
  %v349 = vmax.f32 %v305, 0.0
  %v350 = vmax.f32 %v308, 0.0
  %v351 = vmax.f32 %v313, 0.0
  %v352 = vmax.f32 %v316, 0.0
  %v353 = vmax.f32 %v321, 0.0
  %v354 = vmax.f32 %v324, 0.0
  %v355 = vmax.f32 %v329, 0.0
  %v356 = vmax.f32 %v332, 0.0
  %v357 = vmax.f32 %v337, 0.0
  %v358 = vmax.f32 %v340, 0.0
  %v359 = vpack.c.bf16 %v344, %v343
  %v360 = vpack.c.bf16 %v346, %v345
  %v361 = vpack.c.bf16 %v348, %v347
  %v362 = vpack.c.bf16 %v350, %v349
  %v363 = vpack.c.bf16 %v352, %v351
  %v364 = vpack.c.bf16 %v354, %v353
  %v365 = vpack.c.bf16 %v356, %v355
  %v366 = vpack.c.bf16 %v358, %v357
  %v375 = vunpack.c.l.b16 %v359
  %v376 = vunpack.c.h.b16 %v359
  %v377 = vunpack.c.l.b16 %v360
  %v378 = vunpack.c.h.b16 %v360
  %v379 = vunpack.c.l.b16 %v361
  %v380 = vunpack.c.h.b16 %v361
  %v381 = vunpack.c.l.b16 %v362
  %v382 = vunpack.c.h.b16 %v362
  %v383 = vunpack.c.l.b16 %v363
  %v384 = vunpack.c.h.b16 %v363
  %v385 = vunpack.c.l.b16 %v364
  %v386 = vunpack.c.h.b16 %v364
  %v387 = vunpack.c.l.b16 %v365
  %v388 = vunpack.c.h.b16 %v365
  %v389 = vunpack.c.l.b16 %v366
  %v390 = vunpack.c.h.b16 %v366
  %v391 = vpack.c.b16 %v375, %v375
  %v392 = vpack.c.b16 %v376, %v376
  %v393 = vpack.c.b16 %v377, %v377
  %v394 = vpack.c.b16 %v378, %v378
  %v395 = vpack.c.b16 %v379, %v379
  %v396 = vpack.c.b16 %v380, %v380
  %v397 = vpack.c.b16 %v381, %v381
  %v398 = vpack.c.b16 %v382, %v382
  %v399 = vpack.c.b16 %v383, %v383
  %v400 = vpack.c.b16 %v384, %v384
  %v401 = vpack.c.b16 %v385, %v385
  %v402 = vpack.c.b16 %v386, %v386
  %v403 = vpack.c.b16 %v387, %v387
  %v404 = vpack.c.b16 %v388, %v388
  %v405 = vpack.c.b16 %v389, %v389
  %v406 = vpack.c.b16 %v390, %v390
  %423 = vst [vmem:[%s3] sm:$0xf] %v391
  %424 = vst [vmem:[%s3 + $0x4] sm:$0xf] %v392
  %425 = vst [vmem:[%s3 + $0x8] sm:$0xf] %v393
  %426 = vst [vmem:[%s3 + $0xc] sm:$0xf] %v394
  %427 = vst [vmem:[%s3 + $0x10] sm:$0xf] %v395
  %428 = vst [vmem:[%s3 + $0x14] sm:$0xf] %v396
  %429 = vst [vmem:[%s3 + $0x18] sm:$0xf] %v397
  %430 = vst [vmem:[%s3 + $0x1c] sm:$0xf] %v398
  %431 = vst [vmem:[%s3 + $0x20] sm:$0xf] %v399
  %432 = vst [vmem:[%s3 + $0x24] sm:$0xf] %v400
  %433 = vst [vmem:[%s3 + $0x28] sm:$0xf] %v401
  %434 = vst [vmem:[%s3 + $0x2c] sm:$0xf] %v402
  %435 = vst [vmem:[%s3 + $0x30] sm:$0xf] %v403
  %436 = vst [vmem:[%s3 + $0x34] sm:$0xf] %v404
  %437 = vst [vmem:[%s3 + $0x38] sm:$0xf] %v405
  %438 = vst [vmem:[%s3 + $0x3c] sm:$0xf] %v406
  // Predicated region
  $region14: #{convolutional_layer_forward.3} parent=0 // pred_check
    _
  $region15: #{convolutional_layer_forward.3} parent=0 // pred_check_branch
    %440 = sbr.rel (0) target = $region17
  $region16: #{convolutional_layer_forward.3} parent=0 // pred_region
    _
  $region17: #{convolutional_layer_forward.3} parent=0 // pred_fallthru
    _
  // Predicated region
  $region18: #{convolutional_layer_forward.3} parent=0 // pred_check
    _
  $region19: #{convolutional_layer_forward.3} parent=0 // pred_check_branch
    %442 = sbr.rel (0) target = $region21
  $region20: #{convolutional_layer_forward.3} parent=0 // pred_region
    _
  $region21: #{convolutional_layer_forward.3} parent=0 // pred_fallthru
    _

// kernel: convolutional_layer_forward.4
$region0: #{convolutional_layer_forward.4}
  #allocation0 [shape = 'u32[]', space=smem, size = 0x4, offset = 0x4, fixed_abs, tag = 'smem constant byte address 0x4 - core index']
  #allocation1 [shape = 'u32[144,128]{1,0:T(1,128)}', space=vmem, size = 0x12000, scoped, tag = 'internal scratch']
  %s0 = inlined_call_operand.vmem [shape: bf16[24,512], index: 0, kind: input, shape index: {}]
  %s1 = inlined_call_operand.vmem [shape: bf16[512,128], index: 1, kind: input, shape index: {}]
  %s2 = inlined_call_operand.vmem [shape: f32[1,128], index: 2, kind: input, shape index: {}]
  %s3 = inlined_call_operand.vmem [shape: bf16[24,128], index: 3, kind: output, shape index: {}]
  %s4 = sld [smem:[#allocation0]]
  $region22: #{convolutional_layer_forward.4} parent=0
    _
  %s6 = ssub.s32 1, %s4
  %s7 = scalar_select 0, %s6, %s4
  // Predicated region
  $region2: #{convolutional_layer_forward.4} parent=0 // pred_check
    _
  $region3: #{convolutional_layer_forward.4} parent=0 // pred_check_branch
    %9 = sbr.rel (0) target = $region5
  $region4: #{convolutional_layer_forward.4} parent=0 // pred_region
    _
  $region5: #{convolutional_layer_forward.4} parent=0 // pred_fallthru
    _
  // Predicated region
  $region6: #{convolutional_layer_forward.4} parent=0 // pred_check
    _
  $region7: #{convolutional_layer_forward.4} parent=0 // pred_check_branch
    %11 = sbr.rel (0) target = $region9
  $region8: #{convolutional_layer_forward.4} parent=0 // pred_region
    _
  $region9: #{convolutional_layer_forward.4} parent=0 // pred_fallthru
    _
  // Predicated region
  $region10: #{convolutional_layer_forward.4} parent=0 // pred_check
    _
  $region11: #{convolutional_layer_forward.4} parent=0 // pred_check_branch
    %13 = sbr.rel (0) target = $region13
  $region12: #{convolutional_layer_forward.4} parent=0 // pred_region
    _
  $region13: #{convolutional_layer_forward.4} parent=0 // pred_fallthru
    _
  %v15 = vld [vmem:[%s0] sm:$0xff]
  %v16 = vld [vmem:[%s0 + $0x8] sm:$0xff]
  %v17 = vld [vmem:[%s0 + $0x10] sm:$0xff]
  %v18 = vld [vmem:[%s0 + $0x18] sm:$0xff]
  %v19 = vld [vmem:[%s0 + $0x20] sm:$0xff]
  %v20 = vld [vmem:[%s0 + $0x28] sm:$0xff]
  %v21 = vld [vmem:[%s1] sm:$0xf]
  %v22 = vld [vmem:[%s1 + $0x4] sm:$0xf]
  %v23 = vld [vmem:[%s1 + $0x8] sm:$0xf]
  %v24 = vld [vmem:[%s1 + $0xc] sm:$0xf]
  %v25 = vld [vmem:[%s1 + $0x10] sm:$0xf]
  %v26 = vld [vmem:[%s1 + $0x14] sm:$0xf]
  %v27 = vld [vmem:[%s1 + $0x18] sm:$0xf]
  %v28 = vld [vmem:[%s1 + $0x1c] sm:$0xf]
  %v29 = vld [vmem:[%s1 + $0x20] sm:$0xf]
  %v30 = vld [vmem:[%s1 + $0x24] sm:$0xf]
  %v31 = vld [vmem:[%s1 + $0x28] sm:$0xf]
  %v32 = vld [vmem:[%s1 + $0x2c] sm:$0xf]
  %v33 = vld [vmem:[%s1 + $0x30] sm:$0xf]
  %v34 = vld [vmem:[%s1 + $0x34] sm:$0xf]
  %v35 = vld [vmem:[%s1 + $0x38] sm:$0xf]
  %v36 = vld [vmem:[%s1 + $0x3c] sm:$0xf]
  %v37 = vld [vmem:[%s1 + $0x40] sm:$0xf]
  %v38 = vld [vmem:[%s1 + $0x44] sm:$0xf]
  %v39 = vld [vmem:[%s1 + $0x48] sm:$0xf]
  %v40 = vld [vmem:[%s1 + $0x4c] sm:$0xf]
  %v41 = vld [vmem:[%s1 + $0x50] sm:$0xf]
  %v42 = vld [vmem:[%s1 + $0x54] sm:$0xf]
  %v43 = vld [vmem:[%s1 + $0x58] sm:$0xf]
  %v44 = vld [vmem:[%s1 + $0x5c] sm:$0xf]
  %v45 = vld [vmem:[%s1 + $0x60] sm:$0xf]
  %v46 = vld [vmem:[%s1 + $0x64] sm:$0xf]
  %v47 = vld [vmem:[%s1 + $0x68] sm:$0xf]
  %v48 = vld [vmem:[%s1 + $0x6c] sm:$0xf]
  %v49 = vld [vmem:[%s1 + $0x70] sm:$0xf]
  %v50 = vld [vmem:[%s1 + $0x74] sm:$0xf]
  %v51 = vld [vmem:[%s1 + $0x78] sm:$0xf]
  %v52 = vld [vmem:[%s1 + $0x7c] sm:$0xf]
  %v53 = vld [vmem:[%s1 + $0x80] sm:$0xf]
  %v54 = vld [vmem:[%s1 + $0x84] sm:$0xf]
  %v55 = vld [vmem:[%s1 + $0x88] sm:$0xf]
  %v56 = vld [vmem:[%s1 + $0x8c] sm:$0xf]
  %v57 = vld [vmem:[%s1 + $0x90] sm:$0xf]
  %v58 = vld [vmem:[%s1 + $0x94] sm:$0xf]
  %v59 = vld [vmem:[%s1 + $0x98] sm:$0xf]
  %v60 = vld [vmem:[%s1 + $0x9c] sm:$0xf]
  %v61 = vld [vmem:[%s1 + $0xa0] sm:$0xf]
  %v62 = vld [vmem:[%s1 + $0xa4] sm:$0xf]
  %v63 = vld [vmem:[%s1 + $0xa8] sm:$0xf]
  %v64 = vld [vmem:[%s1 + $0xac] sm:$0xf]
  %v65 = vld [vmem:[%s1 + $0xb0] sm:$0xf]
  %v66 = vld [vmem:[%s1 + $0xb4] sm:$0xf]
  %v67 = vld [vmem:[%s1 + $0xb8] sm:$0xf]
  %v68 = vld [vmem:[%s1 + $0xbc] sm:$0xf]
  %v69 = vld [vmem:[%s1 + $0xc0] sm:$0xf]
  %v70 = vld [vmem:[%s1 + $0xc4] sm:$0xf]
  %v71 = vld [vmem:[%s1 + $0xc8] sm:$0xf]
  %v72 = vld [vmem:[%s1 + $0xcc] sm:$0xf]
  %v73 = vld [vmem:[%s1 + $0xd0] sm:$0xf]
  %v74 = vld [vmem:[%s1 + $0xd4] sm:$0xf]
  %v75 = vld [vmem:[%s1 + $0xd8] sm:$0xf]
  %v76 = vld [vmem:[%s1 + $0xdc] sm:$0xf]
  %v77 = vld [vmem:[%s1 + $0xe0] sm:$0xf]
  %v78 = vld [vmem:[%s1 + $0xe4] sm:$0xf]
  %v79 = vld [vmem:[%s1 + $0xe8] sm:$0xf]
  %v80 = vld [vmem:[%s1 + $0xec] sm:$0xf]
  %v81 = vld [vmem:[%s1 + $0xf0] sm:$0xf]
  %v82 = vld [vmem:[%s1 + $0xf4] sm:$0xf]
  %v83 = vld [vmem:[%s1 + $0xf8] sm:$0xf]
  %v84 = vld [vmem:[%s1 + $0xfc] sm:$0xf]
  %v85 = vld [vmem:[%s2] sm:$0x1]
  %v87 = vlaneseq
  %v88 = vshrl.u32 %v87, 7
  %v89 = vsub.s32 0, %v88
  %v90 = vrot.slane %v85, %v89
  %v98 = vunpack.c.l.b16 %v15
  %v99 = vunpack.c.h.b16 %v15
  %v100 = vunpack.c.l.b16 %v16
  %v101 = vunpack.c.h.b16 %v16
  %v102 = vunpack.c.l.b16 %v17
  %v103 = vunpack.c.h.b16 %v17
  %v104 = vunpack.c.l.b16 %v18
  %v105 = vunpack.c.h.b16 %v18
  %v106 = vunpack.c.l.b16 %v19
  %v107 = vunpack.c.h.b16 %v19
  %v108 = vunpack.c.l.b16 %v20
  %v109 = vunpack.c.h.b16 %v20
  %v110 = vpack.c.b16 %v102, %v98
  %v111 = vpack.c.b16 %v103, %v99
  %v112 = vpack.c.b16 %v104, %v100
  %v113 = vpack.c.b16 %v105, %v101
  %v114 = vpack.c.b16 %v106, %v106
  %v115 = vpack.c.b16 %v107, %v107
  %v116 = vpack.c.b16 %v108, %v108
  %v117 = vpack.c.b16 %v109, %v109
  %v190 = vunpack.c.l.b16 %v21
  %v191 = vunpack.c.l.b16 %v22
  %v192 = vunpack.c.l.b16 %v23
  %v193 = vunpack.c.l.b16 %v24
  %v194 = vunpack.c.l.b16 %v25
  %v195 = vunpack.c.l.b16 %v26
  %v196 = vunpack.c.l.b16 %v27
  %v197 = vunpack.c.l.b16 %v28
  %v198 = vunpack.c.l.b16 %v29
  %v199 = vunpack.c.l.b16 %v30
  %v200 = vunpack.c.l.b16 %v31
  %v201 = vunpack.c.l.b16 %v32
  %v202 = vunpack.c.l.b16 %v33
  %v203 = vunpack.c.l.b16 %v34
  %v204 = vunpack.c.l.b16 %v35
  %v205 = vunpack.c.l.b16 %v36
  %v206 = vunpack.c.l.b16 %v37
  %v207 = vunpack.c.l.b16 %v38
  %v208 = vunpack.c.l.b16 %v39
  %v209 = vunpack.c.l.b16 %v40
  %v210 = vunpack.c.l.b16 %v41
  %v211 = vunpack.c.l.b16 %v42
  %v212 = vunpack.c.l.b16 %v43
  %v213 = vunpack.c.l.b16 %v44
  %v214 = vunpack.c.l.b16 %v45
  %v215 = vunpack.c.l.b16 %v46
  %v216 = vunpack.c.l.b16 %v47
  %v217 = vunpack.c.l.b16 %v48
  %v218 = vunpack.c.l.b16 %v49
  %v219 = vunpack.c.l.b16 %v50
  %v220 = vunpack.c.l.b16 %v51
  %v221 = vunpack.c.l.b16 %v52
  %v222 = vunpack.c.l.b16 %v53
  %v223 = vunpack.c.l.b16 %v54
  %v224 = vunpack.c.l.b16 %v55
  %v225 = vunpack.c.l.b16 %v56
  %v226 = vunpack.c.l.b16 %v57
  %v227 = vunpack.c.l.b16 %v58
  %v228 = vunpack.c.l.b16 %v59
  %v229 = vunpack.c.l.b16 %v60
  %v230 = vunpack.c.l.b16 %v61
  %v231 = vunpack.c.l.b16 %v62
  %v232 = vunpack.c.l.b16 %v63
  %v233 = vunpack.c.l.b16 %v64
  %v234 = vunpack.c.l.b16 %v65
  %v235 = vunpack.c.l.b16 %v66
  %v236 = vunpack.c.l.b16 %v67
  %v237 = vunpack.c.l.b16 %v68
  %v238 = vunpack.c.l.b16 %v69
  %v239 = vunpack.c.l.b16 %v70
  %v240 = vunpack.c.l.b16 %v71
  %v241 = vunpack.c.l.b16 %v72
  %v242 = vunpack.c.l.b16 %v73
  %v243 = vunpack.c.l.b16 %v74
  %v244 = vunpack.c.l.b16 %v75
  %v245 = vunpack.c.l.b16 %v76
  %v246 = vunpack.c.l.b16 %v77
  %v247 = vunpack.c.l.b16 %v78
  %v248 = vunpack.c.l.b16 %v79
  %v249 = vunpack.c.l.b16 %v80
  %v250 = vunpack.c.l.b16 %v81
  %v251 = vunpack.c.l.b16 %v82
  %v252 = vunpack.c.l.b16 %v83
  %v253 = vunpack.c.l.b16 %v84
  %v254 = vpack.c.b16 %v191, %v190
  %v255 = vpack.c.b16 %v193, %v192
  %v256 = vpack.c.b16 %v195, %v194
  %v257 = vpack.c.b16 %v197, %v196
  %v258 = vpack.c.b16 %v199, %v198
  %v259 = vpack.c.b16 %v201, %v200
  %v260 = vpack.c.b16 %v203, %v202
  %v261 = vpack.c.b16 %v205, %v204
  %v262 = vpack.c.b16 %v207, %v206
  %v263 = vpack.c.b16 %v209, %v208
  %v264 = vpack.c.b16 %v211, %v210
  %v265 = vpack.c.b16 %v213, %v212
  %v266 = vpack.c.b16 %v215, %v214
  %v267 = vpack.c.b16 %v217, %v216
  %v268 = vpack.c.b16 %v219, %v218
  %v269 = vpack.c.b16 %v221, %v220
  %v270 = vpack.c.b16 %v223, %v222
  %v271 = vpack.c.b16 %v225, %v224
  %v272 = vpack.c.b16 %v227, %v226
  %v273 = vpack.c.b16 %v229, %v228
  %v274 = vpack.c.b16 %v231, %v230
  %v275 = vpack.c.b16 %v233, %v232
  %v276 = vpack.c.b16 %v235, %v234
  %v277 = vpack.c.b16 %v237, %v236
  %v278 = vpack.c.b16 %v239, %v238
  %v279 = vpack.c.b16 %v241, %v240
  %v280 = vpack.c.b16 %v243, %v242
  %v281 = vpack.c.b16 %v245, %v244
  %v282 = vpack.c.b16 %v247, %v246
  %v283 = vpack.c.b16 %v249, %v248
  %v284 = vpack.c.b16 %v251, %v250
  %v285 = vpack.c.b16 %v253, %v252
  %318 = vmatprep.subr.bf16.mxu0 0
  %319 = vmatpush1.bf16.msra.mxu0 %v261
  %320 = vmatprep.subr.bf16.mxu0 0
  %321 = vmatpush1.bf16.msra.mxu0 %v260
  %322 = vmatprep.subr.bf16.mxu0 0
  %323 = vmatpush1.bf16.msra.mxu0 %v259
  %324 = vmatprep.subr.bf16.mxu0 0
  %325 = vmatpush1.bf16.msra.mxu0 %v258
  %326 = vmatprep.subr.bf16.mxu0 0
  %327 = vmatpush1.bf16.msra.mxu0 %v257
  %328 = vmatprep.subr.bf16.mxu0 0
  %329 = vmatpush1.bf16.msra.mxu0 %v256
  %330 = vmatprep.subr.bf16.mxu0 0
  %331 = vmatpush1.bf16.msra.mxu0 %v255
  %332 = vmatprep.subr.bf16.mxu0 0
  %333 = vmatpush1.bf16.msra.mxu0 %v254
  %334 = vmatprep.subr.bf16.mxu0 0
  %335 = vmatpush2.bf16.msra.mxu0 %v269
  %336 = vmatprep.subr.bf16.mxu0 0
  %337 = vmatpush2.bf16.msra.mxu0 %v268
  %338 = vmatprep.subr.bf16.mxu0 0
  %339 = vmatpush2.bf16.msra.mxu0 %v267
  %340 = vmatprep.subr.bf16.mxu0 0
  %341 = vmatpush2.bf16.msra.mxu0 %v266
  %342 = vmatprep.subr.bf16.mxu0 0
  %343 = vmatpush2.bf16.msra.mxu0 %v265
  %344 = vmatprep.subr.bf16.mxu0 0
  %345 = vmatpush2.bf16.msra.mxu0 %v264
  %346 = vmatprep.subr.bf16.mxu0 0
  %347 = vmatpush2.bf16.msra.mxu0 %v263
  %348 = vmatprep.subr.bf16.mxu0 0
  %349 = vmatpush2.bf16.msra.mxu0 %v262
  %350 = vmatprep.mubr.bf16.mxu0 %v111
  %351 = vmatmul.mubr.bf16.gmra.mxu0 %v110
  %v352 = vpop.f32.mrf.mxu0
  %v353 = vadd.f32 %v90, %v352
  %v354 = vpop.f32.mrf.mxu0
  %v355 = vpop.f32.mrf.mxu0
  %v356 = vadd.f32 %v90, %v355
  %v357 = vpop.f32.mrf.mxu0
  %358 = vmatprep.mubr.bf16.mxu0 %v115
  %359 = vmatmul.mubr.bf16.gmra.mxu0 %v114
  %v360 = vpop.f32.mrf.mxu0
  %v361 = vadd.f32 %v90, %v360
  %v362 = vpop.f32.mrf.mxu0
  %v363 = vpop.f32.mrf.mxu0
  %v364 = vpop.f32.mrf.mxu0
  %365 = vdwg.mxu0
  %366 = vmatprep.subr.bf16.mxu0 0
  %367 = vmatpush1.bf16.msra.mxu0 %v277
  %368 = vmatprep.subr.bf16.mxu0 0
  %369 = vmatpush1.bf16.msra.mxu0 %v276
  %370 = vmatprep.subr.bf16.mxu0 0
  %371 = vmatpush1.bf16.msra.mxu0 %v275
  %372 = vmatprep.subr.bf16.mxu0 0
  %373 = vmatpush1.bf16.msra.mxu0 %v274
  %374 = vmatprep.subr.bf16.mxu0 0
  %375 = vmatpush1.bf16.msra.mxu0 %v273
  %376 = vmatprep.subr.bf16.mxu0 0
  %377 = vmatpush1.bf16.msra.mxu0 %v272
  %378 = vmatprep.subr.bf16.mxu0 0
  %379 = vmatpush1.bf16.msra.mxu0 %v271
  %380 = vmatprep.subr.bf16.mxu0 0
  %381 = vmatpush1.bf16.msra.mxu0 %v270
  %382 = vmatprep.subr.bf16.mxu0 0
  %383 = vmatpush2.bf16.msra.mxu0 %v285
  %384 = vmatprep.subr.bf16.mxu0 0
  %385 = vmatpush2.bf16.msra.mxu0 %v284
  %386 = vmatprep.subr.bf16.mxu0 0
  %387 = vmatpush2.bf16.msra.mxu0 %v283
  %388 = vmatprep.subr.bf16.mxu0 0
  %389 = vmatpush2.bf16.msra.mxu0 %v282
  %390 = vmatprep.subr.bf16.mxu0 0
  %391 = vmatpush2.bf16.msra.mxu0 %v281
  %392 = vmatprep.subr.bf16.mxu0 0
  %393 = vmatpush2.bf16.msra.mxu0 %v280
  %394 = vmatprep.subr.bf16.mxu0 0
  %395 = vmatpush2.bf16.msra.mxu0 %v279
  %396 = vmatprep.subr.bf16.mxu0 0
  %397 = vmatpush2.bf16.msra.mxu0 %v278
  %398 = vmatprep.mubr.bf16.mxu0 %v113
  %399 = vmatmul.mubr.bf16.gmra.mxu0 %v112
  %v400 = vpop.f32.mrf.mxu0
  %v401 = vadd.f32 %v353, %v400
  %v402 = vpop.f32.mrf.mxu0
  %v403 = vpop.f32.mrf.mxu0
  %v404 = vadd.f32 %v356, %v403
  %v405 = vpop.f32.mrf.mxu0
  %406 = vmatprep.mubr.bf16.mxu0 %v117
  %407 = vmatmul.mubr.bf16.gmra.mxu0 %v116
  %v408 = vpop.f32.mrf.mxu0
  %v409 = vadd.f32 %v361, %v408
  %v410 = vpop.f32.mrf.mxu0
  %v411 = vpop.f32.mrf.mxu0
  %v412 = vpop.f32.mrf.mxu0
  %413 = vdwg.mxu0
  %v414 = vmax.f32 %v401, 0.0
  %v415 = vmax.f32 %v404, 0.0
  %v416 = vmax.f32 %v409, 0.0
  %v417 = vpack.c.bf16 %v415, %v414
  %v418 = vpack.c.bf16 %v416, %v416
  %v421 = vunpack.c.l.b16 %v417
  %v422 = vunpack.c.h.b16 %v417
  %v423 = vunpack.c.l.b16 %v418
  %v424 = vpack.c.b16 %v421, %v421
  %v425 = vpack.c.b16 %v422, %v422
  %v426 = vpack.c.b16 %v423, %v423
  %430 = vst [vmem:[%s3] sm:$0xf] %v424
  %431 = vst [vmem:[%s3 + $0x4] sm:$0xf] %v425
  %432 = vst [vmem:[%s3 + $0x8] sm:$0xf] %v426
  // Predicated region
  $region14: #{convolutional_layer_forward.4} parent=0 // pred_check
    _
  $region15: #{convolutional_layer_forward.4} parent=0 // pred_check_branch
    %434 = sbr.rel (0) target = $region17
  $region16: #{convolutional_layer_forward.4} parent=0 // pred_region
    _
  $region17: #{convolutional_layer_forward.4} parent=0 // pred_fallthru
    _
  // Predicated region
  $region18: #{convolutional_layer_forward.4} parent=0 // pred_check
    _
  $region19: #{convolutional_layer_forward.4} parent=0 // pred_check_branch
    %436 = sbr.rel (0) target = $region21
  $region20: #{convolutional_layer_forward.4} parent=0 // pred_region
    _
  $region21: #{convolutional_layer_forward.4} parent=0 // pred_fallthru
    _

// kernel: convolutional_layer_forward.5
$region0: #{convolutional_layer_forward.5}
  #allocation0 [shape = 'u32[]', space=smem, size = 0x4, offset = 0x4, fixed_abs, tag = 'smem constant byte address 0x4 - core index']
  #allocation1 [shape = 'u32[144,128]{1,0:T(1,128)}', space=vmem, size = 0x12000, scoped, tag = 'internal scratch']
  %s0 = inlined_call_operand.vmem [shape: bf16[8,576], index: 0, kind: input, shape index: {}]
  %s1 = inlined_call_operand.vmem [shape: bf16[576,128], index: 1, kind: input, shape index: {}]
  %s2 = inlined_call_operand.vmem [shape: f32[1,128], index: 2, kind: input, shape index: {}]
  %s3 = inlined_call_operand.vmem [shape: f32[8,128], index: 3, kind: output, shape index: {}]
  %s4 = sld [smem:[#allocation0]]
  $region22: #{convolutional_layer_forward.5} parent=0
    _
  %s6 = ssub.s32 1, %s4
  %s7 = scalar_select 0, %s6, %s4
  // Predicated region
  $region2: #{convolutional_layer_forward.5} parent=0 // pred_check
    _
  $region3: #{convolutional_layer_forward.5} parent=0 // pred_check_branch
    %9 = sbr.rel (0) target = $region5
  $region4: #{convolutional_layer_forward.5} parent=0 // pred_region
    _
  $region5: #{convolutional_layer_forward.5} parent=0 // pred_fallthru
    _
  // Predicated region
  $region6: #{convolutional_layer_forward.5} parent=0 // pred_check
    _
  $region7: #{convolutional_layer_forward.5} parent=0 // pred_check_branch
    %11 = sbr.rel (0) target = $region9
  $region8: #{convolutional_layer_forward.5} parent=0 // pred_region
    _
  $region9: #{convolutional_layer_forward.5} parent=0 // pred_fallthru
    _
  // Predicated region
  $region10: #{convolutional_layer_forward.5} parent=0 // pred_check
    _
  $region11: #{convolutional_layer_forward.5} parent=0 // pred_check_branch
    %13 = sbr.rel (0) target = $region13
  $region12: #{convolutional_layer_forward.5} parent=0 // pred_region
    _
  $region13: #{convolutional_layer_forward.5} parent=0 // pred_fallthru
    _
  %v15 = vld [vmem:[%s0] sm:$0xff]
  %v16 = vld [vmem:[%s0 + $0x8] sm:$0xff]
  %v17 = vld [vmem:[%s0 + $0x10] sm:$0xf]
  %v18 = vld [vmem:[%s1] sm:$0xf]
  %v19 = vld [vmem:[%s1 + $0x4] sm:$0xf]
  %v20 = vld [vmem:[%s1 + $0x8] sm:$0xf]
  %v21 = vld [vmem:[%s1 + $0xc] sm:$0xf]
  %v22 = vld [vmem:[%s1 + $0x10] sm:$0xf]
  %v23 = vld [vmem:[%s1 + $0x14] sm:$0xf]
  %v24 = vld [vmem:[%s1 + $0x18] sm:$0xf]
  %v25 = vld [vmem:[%s1 + $0x1c] sm:$0xf]
  %v26 = vld [vmem:[%s1 + $0x20] sm:$0xf]
  %v27 = vld [vmem:[%s1 + $0x24] sm:$0xf]
  %v28 = vld [vmem:[%s1 + $0x28] sm:$0xf]
  %v29 = vld [vmem:[%s1 + $0x2c] sm:$0xf]
  %v30 = vld [vmem:[%s1 + $0x30] sm:$0xf]
  %v31 = vld [vmem:[%s1 + $0x34] sm:$0xf]
  %v32 = vld [vmem:[%s1 + $0x38] sm:$0xf]
  %v33 = vld [vmem:[%s1 + $0x3c] sm:$0xf]
  %v34 = vld [vmem:[%s1 + $0x40] sm:$0xf]
  %v35 = vld [vmem:[%s1 + $0x44] sm:$0xf]
  %v36 = vld [vmem:[%s1 + $0x48] sm:$0xf]
  %v37 = vld [vmem:[%s1 + $0x4c] sm:$0xf]
  %v38 = vld [vmem:[%s1 + $0x50] sm:$0xf]
  %v39 = vld [vmem:[%s1 + $0x54] sm:$0xf]
  %v40 = vld [vmem:[%s1 + $0x58] sm:$0xf]
  %v41 = vld [vmem:[%s1 + $0x5c] sm:$0xf]
  %v42 = vld [vmem:[%s1 + $0x60] sm:$0xf]
  %v43 = vld [vmem:[%s1 + $0x64] sm:$0xf]
  %v44 = vld [vmem:[%s1 + $0x68] sm:$0xf]
  %v45 = vld [vmem:[%s1 + $0x6c] sm:$0xf]
  %v46 = vld [vmem:[%s1 + $0x70] sm:$0xf]
  %v47 = vld [vmem:[%s1 + $0x74] sm:$0xf]
  %v48 = vld [vmem:[%s1 + $0x78] sm:$0xf]
  %v49 = vld [vmem:[%s1 + $0x7c] sm:$0xf]
  %v50 = vld [vmem:[%s1 + $0x80] sm:$0xf]
  %v51 = vld [vmem:[%s1 + $0x84] sm:$0xf]
  %v52 = vld [vmem:[%s1 + $0x88] sm:$0xf]
  %v53 = vld [vmem:[%s1 + $0x8c] sm:$0xf]
  %v54 = vld [vmem:[%s1 + $0x90] sm:$0xf]
  %v55 = vld [vmem:[%s1 + $0x94] sm:$0xf]
  %v56 = vld [vmem:[%s1 + $0x98] sm:$0xf]
  %v57 = vld [vmem:[%s1 + $0x9c] sm:$0xf]
  %v58 = vld [vmem:[%s1 + $0xa0] sm:$0xf]
  %v59 = vld [vmem:[%s1 + $0xa4] sm:$0xf]
  %v60 = vld [vmem:[%s1 + $0xa8] sm:$0xf]
  %v61 = vld [vmem:[%s1 + $0xac] sm:$0xf]
  %v62 = vld [vmem:[%s1 + $0xb0] sm:$0xf]
  %v63 = vld [vmem:[%s1 + $0xb4] sm:$0xf]
  %v64 = vld [vmem:[%s1 + $0xb8] sm:$0xf]
  %v65 = vld [vmem:[%s1 + $0xbc] sm:$0xf]
  %v66 = vld [vmem:[%s1 + $0xc0] sm:$0xf]
  %v67 = vld [vmem:[%s1 + $0xc4] sm:$0xf]
  %v68 = vld [vmem:[%s1 + $0xc8] sm:$0xf]
  %v69 = vld [vmem:[%s1 + $0xcc] sm:$0xf]
  %v70 = vld [vmem:[%s1 + $0xd0] sm:$0xf]
  %v71 = vld [vmem:[%s1 + $0xd4] sm:$0xf]
  %v72 = vld [vmem:[%s1 + $0xd8] sm:$0xf]
  %v73 = vld [vmem:[%s1 + $0xdc] sm:$0xf]
  %v74 = vld [vmem:[%s1 + $0xe0] sm:$0xf]
  %v75 = vld [vmem:[%s1 + $0xe4] sm:$0xf]
  %v76 = vld [vmem:[%s1 + $0xe8] sm:$0xf]
  %v77 = vld [vmem:[%s1 + $0xec] sm:$0xf]
  %v78 = vld [vmem:[%s1 + $0xf0] sm:$0xf]
  %v79 = vld [vmem:[%s1 + $0xf4] sm:$0xf]
  %v80 = vld [vmem:[%s1 + $0xf8] sm:$0xf]
  %v81 = vld [vmem:[%s1 + $0xfc] sm:$0xf]
  %v82 = vld [vmem:[%s1 + $0x100] sm:$0xf]
  %v83 = vld [vmem:[%s1 + $0x104] sm:$0xf]
  %v84 = vld [vmem:[%s1 + $0x108] sm:$0xf]
  %v85 = vld [vmem:[%s1 + $0x10c] sm:$0xf]
  %v86 = vld [vmem:[%s1 + $0x110] sm:$0xf]
  %v87 = vld [vmem:[%s1 + $0x114] sm:$0xf]
  %v88 = vld [vmem:[%s1 + $0x118] sm:$0xf]
  %v89 = vld [vmem:[%s1 + $0x11c] sm:$0xf]
  %v90 = vld [vmem:[%s2] sm:$0x1]
  %v92 = vlaneseq
  %v93 = vshrl.u32 %v92, 7
  %v94 = vsub.s32 0, %v93
  %v95 = vrot.slane %v90, %v94
  %v100 = vunpack.c.l.b16 %v15
  %v101 = vunpack.c.h.b16 %v15
  %v102 = vunpack.c.l.b16 %v16
  %v103 = vunpack.c.h.b16 %v16
  %v104 = vunpack.c.l.b16 %v17
  %v105 = vpack.c.b16 %v100, %v100
  %v106 = vpack.c.b16 %v101, %v101
  %v107 = vpack.c.b16 %v102, %v102
  %v108 = vpack.c.b16 %v103, %v103
  %v109 = vpack.c.b16 %v104, %v104
  %v186 = vunpack.c.l.b16 %v18
  %v187 = vunpack.c.l.b16 %v19
  %v188 = vunpack.c.l.b16 %v20
  %v189 = vunpack.c.l.b16 %v21
  %v190 = vunpack.c.l.b16 %v22
  %v191 = vunpack.c.l.b16 %v23
  %v192 = vunpack.c.l.b16 %v24
  %v193 = vunpack.c.l.b16 %v25
  %v194 = vunpack.c.l.b16 %v26
  %v195 = vunpack.c.l.b16 %v27
  %v196 = vunpack.c.l.b16 %v28
  %v197 = vunpack.c.l.b16 %v29
  %v198 = vunpack.c.l.b16 %v30
  %v199 = vunpack.c.l.b16 %v31
  %v200 = vunpack.c.l.b16 %v32
  %v201 = vunpack.c.l.b16 %v33
  %v202 = vunpack.c.l.b16 %v34
  %v203 = vunpack.c.l.b16 %v35
  %v204 = vunpack.c.l.b16 %v36
  %v205 = vunpack.c.l.b16 %v37
  %v206 = vunpack.c.l.b16 %v38
  %v207 = vunpack.c.l.b16 %v39
  %v208 = vunpack.c.l.b16 %v40
  %v209 = vunpack.c.l.b16 %v41
  %v210 = vunpack.c.l.b16 %v42
  %v211 = vunpack.c.l.b16 %v43
  %v212 = vunpack.c.l.b16 %v44
  %v213 = vunpack.c.l.b16 %v45
  %v214 = vunpack.c.l.b16 %v46
  %v215 = vunpack.c.l.b16 %v47
  %v216 = vunpack.c.l.b16 %v48
  %v217 = vunpack.c.l.b16 %v49
  %v218 = vunpack.c.l.b16 %v50
  %v219 = vunpack.c.l.b16 %v51
  %v220 = vunpack.c.l.b16 %v52
  %v221 = vunpack.c.l.b16 %v53
  %v222 = vunpack.c.l.b16 %v54
  %v223 = vunpack.c.l.b16 %v55
  %v224 = vunpack.c.l.b16 %v56
  %v225 = vunpack.c.l.b16 %v57
  %v226 = vunpack.c.l.b16 %v58
  %v227 = vunpack.c.l.b16 %v59
  %v228 = vunpack.c.l.b16 %v60
  %v229 = vunpack.c.l.b16 %v61
  %v230 = vunpack.c.l.b16 %v62
  %v231 = vunpack.c.l.b16 %v63
  %v232 = vunpack.c.l.b16 %v64
  %v233 = vunpack.c.l.b16 %v65
  %v234 = vunpack.c.l.b16 %v66
  %v235 = vunpack.c.l.b16 %v67
  %v236 = vunpack.c.l.b16 %v68
  %v237 = vunpack.c.l.b16 %v69
  %v238 = vunpack.c.l.b16 %v70
  %v239 = vunpack.c.l.b16 %v71
  %v240 = vunpack.c.l.b16 %v72
  %v241 = vunpack.c.l.b16 %v73
  %v242 = vunpack.c.l.b16 %v74
  %v243 = vunpack.c.l.b16 %v75
  %v244 = vunpack.c.l.b16 %v76
  %v245 = vunpack.c.l.b16 %v77
  %v246 = vunpack.c.l.b16 %v78
  %v247 = vunpack.c.l.b16 %v79
  %v248 = vunpack.c.l.b16 %v80
  %v249 = vunpack.c.l.b16 %v81
  %v250 = vunpack.c.l.b16 %v82
  %v251 = vunpack.c.l.b16 %v83
  %v252 = vunpack.c.l.b16 %v84
  %v253 = vunpack.c.l.b16 %v85
  %v254 = vunpack.c.l.b16 %v86
  %v255 = vunpack.c.l.b16 %v87
  %v256 = vunpack.c.l.b16 %v88
  %v257 = vunpack.c.l.b16 %v89
  %v258 = vpack.c.b16 %v187, %v186
  %v259 = vpack.c.b16 %v189, %v188
  %v260 = vpack.c.b16 %v191, %v190
  %v261 = vpack.c.b16 %v193, %v192
  %v262 = vpack.c.b16 %v195, %v194
  %v263 = vpack.c.b16 %v197, %v196
  %v264 = vpack.c.b16 %v199, %v198
  %v265 = vpack.c.b16 %v201, %v200
  %v266 = vpack.c.b16 %v203, %v202
  %v267 = vpack.c.b16 %v205, %v204
  %v268 = vpack.c.b16 %v207, %v206
  %v269 = vpack.c.b16 %v209, %v208
  %v270 = vpack.c.b16 %v211, %v210
  %v271 = vpack.c.b16 %v213, %v212
  %v272 = vpack.c.b16 %v215, %v214
  %v273 = vpack.c.b16 %v217, %v216
  %v274 = vpack.c.b16 %v219, %v218
  %v275 = vpack.c.b16 %v221, %v220
  %v276 = vpack.c.b16 %v223, %v222
  %v277 = vpack.c.b16 %v225, %v224
  %v278 = vpack.c.b16 %v227, %v226
  %v279 = vpack.c.b16 %v229, %v228
  %v280 = vpack.c.b16 %v231, %v230
  %v281 = vpack.c.b16 %v233, %v232
  %v282 = vpack.c.b16 %v235, %v234
  %v283 = vpack.c.b16 %v237, %v236
  %v284 = vpack.c.b16 %v239, %v238
  %v285 = vpack.c.b16 %v241, %v240
  %v286 = vpack.c.b16 %v243, %v242
  %v287 = vpack.c.b16 %v245, %v244
  %v288 = vpack.c.b16 %v247, %v246
  %v289 = vpack.c.b16 %v249, %v248
  %v290 = vpack.c.b16 %v251, %v250
  %v291 = vpack.c.b16 %v253, %v252
  %v292 = vpack.c.b16 %v255, %v254
  %v293 = vpack.c.b16 %v257, %v256
  %vm330 = vcmask 523264
  %v332 = vsel %vm330, %v109, 0
  %334 = vmatprep.subr.bf16.mxu0 0
  %335 = vmatpush1.bf16.msra.mxu0 %v265
  %336 = vmatprep.subr.bf16.mxu0 0
  %337 = vmatpush1.bf16.msra.mxu0 %v264
  %338 = vmatprep.subr.bf16.mxu0 0
  %339 = vmatpush1.bf16.msra.mxu0 %v263
  %340 = vmatprep.subr.bf16.mxu0 0
  %341 = vmatpush1.bf16.msra.mxu0 %v262
  %342 = vmatprep.subr.bf16.mxu0 0
  %343 = vmatpush1.bf16.msra.mxu0 %v261
  %344 = vmatprep.subr.bf16.mxu0 0
  %345 = vmatpush1.bf16.msra.mxu0 %v260
  %346 = vmatprep.subr.bf16.mxu0 0
  %347 = vmatpush1.bf16.msra.mxu0 %v259
  %348 = vmatprep.subr.bf16.mxu0 0
  %349 = vmatpush1.bf16.msra.mxu0 %v258
  %350 = vmatprep.subr.bf16.mxu0 0
  %351 = vmatpush2.bf16.msra.mxu0 %v273
  %352 = vmatprep.subr.bf16.mxu0 0
  %353 = vmatpush2.bf16.msra.mxu0 %v272
  %354 = vmatprep.subr.bf16.mxu0 0
  %355 = vmatpush2.bf16.msra.mxu0 %v271
  %356 = vmatprep.subr.bf16.mxu0 0
  %357 = vmatpush2.bf16.msra.mxu0 %v270
  %358 = vmatprep.subr.bf16.mxu0 0
  %359 = vmatpush2.bf16.msra.mxu0 %v269
  %360 = vmatprep.subr.bf16.mxu0 0
  %361 = vmatpush2.bf16.msra.mxu0 %v268
  %362 = vmatprep.subr.bf16.mxu0 0
  %363 = vmatpush2.bf16.msra.mxu0 %v267
  %364 = vmatprep.subr.bf16.mxu0 0
  %365 = vmatpush2.bf16.msra.mxu0 %v266
  %366 = vmatprep.mubr.bf16.mxu0 %v106
  %367 = vmatmul.mubr.bf16.gmra.mxu0 %v105
  %v368 = vpop.f32.mrf.mxu0
  %v369 = vadd.f32 %v95, %v368
  %v370 = vpop.f32.mrf.mxu0
  %v371 = vpop.f32.mrf.mxu0
  %v372 = vpop.f32.mrf.mxu0
  %373 = vdwg.mxu0
  %374 = vmatprep.subr.bf16.mxu0 0
  %375 = vmatpush1.bf16.msra.mxu0 %v281
  %376 = vmatprep.subr.bf16.mxu0 0
  %377 = vmatpush1.bf16.msra.mxu0 %v280
  %378 = vmatprep.subr.bf16.mxu0 0
  %379 = vmatpush1.bf16.msra.mxu0 %v279
  %380 = vmatprep.subr.bf16.mxu0 0
  %381 = vmatpush1.bf16.msra.mxu0 %v278
  %382 = vmatprep.subr.bf16.mxu0 0
  %383 = vmatpush1.bf16.msra.mxu0 %v277
  %384 = vmatprep.subr.bf16.mxu0 0
  %385 = vmatpush1.bf16.msra.mxu0 %v276
  %386 = vmatprep.subr.bf16.mxu0 0
  %387 = vmatpush1.bf16.msra.mxu0 %v275
  %388 = vmatprep.subr.bf16.mxu0 0
  %389 = vmatpush1.bf16.msra.mxu0 %v274
  %390 = vmatprep.subr.bf16.mxu0 0
  %391 = vmatpush2.bf16.msra.mxu0 %v289
  %392 = vmatprep.subr.bf16.mxu0 0
  %393 = vmatpush2.bf16.msra.mxu0 %v288
  %394 = vmatprep.subr.bf16.mxu0 0
  %395 = vmatpush2.bf16.msra.mxu0 %v287
  %396 = vmatprep.subr.bf16.mxu0 0
  %397 = vmatpush2.bf16.msra.mxu0 %v286
  %398 = vmatprep.subr.bf16.mxu0 0
  %399 = vmatpush2.bf16.msra.mxu0 %v285
  %400 = vmatprep.subr.bf16.mxu0 0
  %401 = vmatpush2.bf16.msra.mxu0 %v284
  %402 = vmatprep.subr.bf16.mxu0 0
  %403 = vmatpush2.bf16.msra.mxu0 %v283
  %404 = vmatprep.subr.bf16.mxu0 0
  %405 = vmatpush2.bf16.msra.mxu0 %v282
  %406 = vmatprep.mubr.bf16.mxu0 %v108
  %407 = vmatmul.mubr.bf16.gmra.mxu0 %v107
  %v408 = vpop.f32.mrf.mxu0
  %v409 = vadd.f32 %v369, %v408
  %v410 = vpop.f32.mrf.mxu0
  %v411 = vpop.f32.mrf.mxu0
  %v412 = vpop.f32.mrf.mxu0
  %413 = vdwg.mxu0
  %414 = vmatprep.subr.bf16.mxu0 0
  %415 = vmatpush1.bf16.msra.mxu0 0
  %416 = vmatprep.subr.bf16.mxu0 0
  %417 = vmatpush1.bf16.msra.mxu0 0
  %418 = vmatprep.subr.bf16.mxu0 0
  %419 = vmatpush1.bf16.msra.mxu0 0
  %420 = vmatprep.subr.bf16.mxu0 0
  %421 = vmatpush1.bf16.msra.mxu0 0
  %422 = vmatprep.subr.bf16.mxu0 0
  %423 = vmatpush1.bf16.msra.mxu0 %v293
  %424 = vmatprep.subr.bf16.mxu0 0
  %425 = vmatpush1.bf16.msra.mxu0 %v292
  %426 = vmatprep.subr.bf16.mxu0 0
  %427 = vmatpush1.bf16.msra.mxu0 %v291
  %428 = vmatprep.subr.bf16.mxu0 0
  %429 = vmatpush1.bf16.msra.mxu0 %v290
  %430 = vmatprep.subr.bf16.mxu0 0
  %431 = vmatpush2.bf16.msra.mxu0 0
  %432 = vmatprep.subr.bf16.mxu0 0
  %433 = vmatpush2.bf16.msra.mxu0 0
  %434 = vmatprep.subr.bf16.mxu0 0
  %435 = vmatpush2.bf16.msra.mxu0 0
  %436 = vmatprep.subr.bf16.mxu0 0
  %437 = vmatpush2.bf16.msra.mxu0 0
  %438 = vmatprep.subr.bf16.mxu0 0
  %439 = vmatpush2.bf16.msra.mxu0 0
  %440 = vmatprep.subr.bf16.mxu0 0
  %441 = vmatpush2.bf16.msra.mxu0 0
  %442 = vmatprep.subr.bf16.mxu0 0
  %443 = vmatpush2.bf16.msra.mxu0 0
  %444 = vmatprep.subr.bf16.mxu0 0
  %445 = vmatpush2.bf16.msra.mxu0 0
  %446 = vmatprep.mubr.bf16.mxu0 0
  %447 = vmatmul.mubr.bf16.gmra.mxu0 %v332
  %v448 = vpop.f32.mrf.mxu0
  %v449 = vadd.f32 %v409, %v448
  %v450 = vpop.f32.mrf.mxu0
  %v451 = vpop.f32.mrf.mxu0
  %v452 = vpop.f32.mrf.mxu0
  %453 = vdwg.mxu0
  %v454 = vmax.f32 %v449, 0.0
  %455 = vst [vmem:[%s3] sm:$0xff] %v454
  // Predicated region
  $region14: #{convolutional_layer_forward.5} parent=0 // pred_check
    _
  $region15: #{convolutional_layer_forward.5} parent=0 // pred_check_branch
    %457 = sbr.rel (0) target = $region17
  $region16: #{convolutional_layer_forward.5} parent=0 // pred_region
    _
  $region17: #{convolutional_layer_forward.5} parent=0 // pred_fallthru
    _
  // Predicated region
  $region18: #{convolutional_layer_forward.5} parent=0 // pred_check
    _
  $region19: #{convolutional_layer_forward.5} parent=0 // pred_check_branch
    %459 = sbr.rel (0) target = $region21
  $region20: #{convolutional_layer_forward.5} parent=0 // pred_region
    _
  $region21: #{convolutional_layer_forward.5} parent=0 // pred_fallthru
    _

</llo_original>
